<compile_context>
chip_gen: v7x
topology: tpu7x:2x2x1
jax: 0.10.0
libtpu: 0.0.40
codegen_flags: <defaults>
</compile_context>

<pallas_src>
import math

import jax
import jax.numpy as jnp
from jax.experimental import pallas as pl
from jax.experimental.pallas import tpu as pltpu


def mlp_kernel(x_ref, wd_ref, bd_ref, o_ref):
    # x_ref : (TB, bw)  activation tile (batch on sublanes, features on lanes)
    # wd_ref: (1, bw)   W[:,0] - W[:,1], VMEM-resident across the grid
    # bd_ref: (1,)      b[0] - b[1], SMEM scalar
    # o_ref : (2, TB)   lane-dense output tile: row 0 = p(class0), row 1 = p(class1)
    x = x_ref[...]
    wd = wd_ref[...]

    # One MXU matvec per tile: d = wd @ x^T -> (1, TB), lane-dense along batch.
    d = jnp.dot(wd, x.T, preferred_element_type=jnp.float32) + bd_ref[0]

    # Binary softmax == sigmoid of the logit difference: one EUP exp + VPU ops,
    # no cross-lane reductions over a 2-wide axis.
    p0 = 1.0 / (1.0 + jnp.exp(-d))          # (1, TB)
    o_ref[0:1, :] = p0.astype(o_ref.dtype)
    o_ref[1:2, :] = (1.0 - p0).astype(o_ref.dtype)


def _pick_batch_tile(B, bw, itemsize=4, x_budget_bytes=8 * 1024 * 1024):
    """Largest batch tile whose double-buffered x block stays under budget."""
    max_tb = max(128, x_budget_bytes // (2 * bw * itemsize))
    tb = min(2048, max_tb, B)
    if tb < B:
        tb = max(128, (tb // 128) * 128)   # lane-dense output block needs %128
    return tb


def mlp_forward(x, w, b, *, tb=None):
    """x: (B, bw); w: (bw, 2); b: (2,) -> (B, 2) float32 softmax probabilities."""
    B, bw = x.shape

    if tb is None:
        tb = _pick_batch_tile(B, bw, x.dtype.itemsize)
    if tb >= B:
        tb = B
    else:
        tb = max(128, (tb // 128) * 128)
    grid = (pl.cdiv(B, tb),)

    # Binary-softmax reformulation: only the logit difference matters.
    wd = (w[:, 0] - w[:, 1]).reshape(1, bw).astype(x.dtype)   # (1, bw)
    bd = (b[0] - b[1]).reshape(1).astype(jnp.float32)         # (1,) -> SMEM

    out_t = pl.pallas_call(
        mlp_kernel,
        out_shape=jax.ShapeDtypeStruct((2, B), jnp.float32),
        grid=grid,
        in_specs=[
            pl.BlockSpec((tb, bw), lambda i: (i, 0)),          # streamed x tiles
            pl.BlockSpec((1, bw), lambda i: (0, 0)),           # resident weight-diff row
            pl.BlockSpec(memory_space=pltpu.MemorySpace.SMEM), # bias-diff scalar
        ],
        out_specs=pl.BlockSpec((2, tb), lambda i: (0, i)),     # lane-dense output
        compiler_params=pltpu.CompilerParams(
            dimension_semantics=("parallel",)),                # megacore-shardable
    )(x, wd, bd)

    # Present the module's (B, 2) layout; this transpose touches only 2*B floats.
    return out_t.T


def init_params(key, bw):
    """Deterministic He (kaiming_uniform) init for Linear(bw, 2), zero bias."""
    fan_in = bw
    bound = math.sqrt(6.0 / fan_in)  # kaiming_uniform_ default (a=0) bound
    # PyTorch weight is (2, bw); we store its transpose (bw, 2).
    w_t = jax.random.uniform(key, (2, bw), minval=-bound, maxval=bound,
                             dtype=jnp.float32)
    w = w_t.T
    b = jnp.zeros((2,), dtype=jnp.float32)
    return w, b


if __name__ == "__main__":
    B, bw = 256, 32
    key = jax.random.PRNGKey(0)
    k_x, k_w = jax.random.split(key)

    # MLP.forward flattens to (B, -1), so we build (B, bw) directly.
    x = jax.random.normal(k_x, (B, bw), dtype=jnp.float32)
    w, b = init_params(k_w, bw)

    # Force the tiled (grid=2) path so the pipelined / lane-dense code path is
    # exercised even at this small demo size.
    out = mlp_forward(x, w, b, tb=128)
    out = jax.block_until_ready(out)

    # Sanity check vs. pure-JAX reference (linear + softmax).
    ref = jax.nn.softmax(x @ w + b[None, :], axis=-1)
    assert out.shape == (B, 2)
    assert jnp.allclose(out, ref, atol=1e-5, rtol=1e-5)
    assert jnp.allclose(jnp.sum(out, axis=-1), 1.0, atol=1e-5)

    print("KERNEL_OK")
</pallas_src>

<mosaic_0001>
module attributes {stable_mosaic.version = 11 : i64} {
  func.func @mlp_kernel(%arg0: i32, %arg1: memref<128x32xf32, #tpu.memory_space<vmem>>, %arg2: memref<1x32xf32, #tpu.memory_space<vmem>>, %arg3: memref<1xf32, #tpu.memory_space<smem>>, %arg4: memref<2x128xf32, #tpu.memory_space<vmem>>) attributes {dimension_semantics = [#tpu.dimension_semantics<parallel>], iteration_bounds = array<i64: 2>, scalar_prefetch = 0 : i64, scratch_operands = 0 : i64, tpu.core_type = #tpu.core_type<tc>, window_params = [{transform_indices = @transform_0, window_bounds = array<i64: 128, 32>}, {pipeline_mode = #tpu.pipeline_mode<synchronous>, transform_indices = @transform_1, window_bounds = array<i64: 1, 32>}, {transform_indices = @transform_2, window_bounds = array<i64: 1>}, {transform_indices = @transform_3, window_bounds = array<i64: 2, 128>}]} {
    %c0 = arith.constant 0 : index
    %c0_0 = arith.constant 0 : index
    %0 = vector.load %arg1[%c0, %c0_0] : memref<128x32xf32, #tpu.memory_space<vmem>>, vector<128x32xf32>
    %c0_1 = arith.constant 0 : index
    %c0_2 = arith.constant 0 : index
    %1 = vector.load %arg2[%c0_1, %c0_2] : memref<1x32xf32, #tpu.memory_space<vmem>>, vector<1x32xf32>
    %2 = tpu.transpose %0, [1, 0] : vector<128x32xf32> -> vector<32x128xf32>
    %cst = arith.constant dense<0.000000e+00> : vector<1x128xf32>
    %3 = tpu.matmul %1, %2, %cst {dimension_numbers = #tpu.dot_dimension_numbers<[1], [0], [0], [1], [0, 0, 1, 1], [], []>} : vector<1x32xf32>, vector<32x128xf32>, vector<1x128xf32> -> vector<1x128xf32>
    %c0_3 = arith.constant 0 : index
    %4 = memref.load %arg3[%c0_3] : memref<1xf32, #tpu.memory_space<smem>>
    %5 = vector.broadcast %4 : f32 to vector<1x128xf32>
    %6 = arith.addf %3, %5 : vector<1x128xf32>
    %cst_4 = arith.constant 0.000000e+00 : f32
    %7 = vector.broadcast %cst_4 : f32 to vector<1x128xf32>
    %8 = arith.subf %7, %6 : vector<1x128xf32>
    %9 = math.exp %8 : vector<1x128xf32>
    %cst_5 = arith.constant 1.000000e+00 : f32
    %10 = vector.broadcast %cst_5 : f32 to vector<1x128xf32>
    %11 = arith.addf %10, %9 : vector<1x128xf32>
    %cst_6 = arith.constant 1.000000e+00 : f32
    %12 = vector.broadcast %cst_6 : f32 to vector<1x128xf32>
    %13 = arith.divf %12, %11 : vector<1x128xf32>
    %c0_7 = arith.constant 0 : index
    %c0_8 = arith.constant 0 : index
    %14 = vector.load %arg4[%c0_7, %c0_8] : memref<2x128xf32, #tpu.memory_space<vmem>>, vector<1x128xf32>
    tpu.vector_store %arg4[%c0_7, %c0_8], %13 {strides = array<i32>} : memref<2x128xf32, #tpu.memory_space<vmem>>, vector<1x128xf32>,
    %cst_9 = arith.constant 1.000000e+00 : f32
    %15 = vector.broadcast %cst_9 : f32 to vector<1x128xf32>
    %16 = arith.subf %15, %13 : vector<1x128xf32>
    %c1 = arith.constant 1 : index
    %c0_10 = arith.constant 0 : index
    %17 = vector.load %arg4[%c1, %c0_10] : memref<2x128xf32, #tpu.memory_space<vmem>>, vector<1x128xf32>
    tpu.vector_store %arg4[%c1, %c0_10], %16 {strides = array<i32>} : memref<2x128xf32, #tpu.memory_space<vmem>>, vector<1x128xf32>,
    return
  }
  func.func @transform_0(%arg0: i32) -> (i32, i32) {
    %c0_i32 = arith.constant 0 : i32
    %c0_i32_0 = arith.constant 0 : i32
    return %arg0, %c0_i32 : i32, i32
  }
  func.func @transform_1(%arg0: i32) -> (i32, i32) {
    %c0_i32 = arith.constant 0 : i32
    %c0_i32_0 = arith.constant 0 : i32
    %c0_i32_1 = arith.constant 0 : i32
    return %c0_i32, %c0_i32_0 : i32, i32
  }
  func.func @transform_2(%arg0: i32) -> i32 {
    %c0_i32 = arith.constant 0 : i32
    %c0_i32_0 = arith.constant 0 : i32
    return %c0_i32 : i32
  }
  func.func @transform_3(%arg0: i32) -> (i32, i32) {
    %c0_i32 = arith.constant 0 : i32
    %c0_i32_0 = arith.constant 0 : i32
    return %c0_i32, %arg0 : i32, i32
  }
}

</mosaic_0001>

<llo_original>
// kernel: tpu_custom_call.1
$region0: #{tpu_custom_call.1}
  #allocation0 [shape = 'u32[]', space=smem, size = 0x4, offset = 0x4, fixed_abs, tag = 'smem constant byte address 0x4 - core index']
  #allocation1 [shape = 'u32[144,128]{1,0:T(1,128)}', space=vmem, size = 0x12000, scoped, tag = 'internal scratch']
  #allocation2 [shape = 'f32[1]{0:T(128)S(6)}', space=smem, size = 0x200, scoped, tag = 'scoped memory for tpu_custom_call.1']
  %s0 = inlined_call_operand.vmem [shape: f32[256,32], index: 0, kind: input, shape index: {}]
  %s1 = inlined_call_operand.vmem [shape: f32[1,32], index: 1, kind: input, shape index: {}]
  %s2 = inlined_call_operand.<no memory space> [shape: f32[1], index: 2, kind: input, shape index: {}]
  %s3 = inlined_call_operand.hbm [shape: f32[2,256], index: 3, kind: output, shape index: {}]
  %s4 = sld [smem:[#allocation0]]
  $region45: #{tpu_custom_call.1} parent=0
    _
  %s6 = ssub.s32 1, %s4
  %s7 = scalar_select 0, %s6, %s4
  %8 = sst [smem:[#allocation2]] %s2
  $region1: #{tpu_custom_call.1} parent=0
    #allocation3 [shape = 'u8[2048]{0}', space=vmem, size = 0x800, scoped, tag = 'output window, operand 0']
    #allocation4 [shape = 's32[2]{0}', space=sflag, size = 0x8, scoped, tag = 'scoped memory for tpu_custom_call.1']
    %9 = vsyncpa [#allocation4], 0
    %s10 = scalar_lea.sflag [#allocation4], 1
    %11 = vsyncpa %s10, 0
    loop: start=0, step=1, limit=4
    $region2: #{tpu_custom_call.1} parent=1 // loop_pre_header
      _
    $region3: #{tpu_custom_call.1} parent=1 // loop_header
      %s13 = sphi 0, %s17
      %p14 = scmp.ge.s32.totalorder %s13, 4
      %s23 = sphi 0, %s25
      %s26 = sphi 0, %s23
      %s27 = sphi 0, %s26
      %s43 = sphi 0, %s27
      %s47 = sphi 0, %s47
      %s49 = sphi 0, %s47
      %s50 = sphi 0, %s49
      %s64 = sphi 0, %s50
      %s68 = sphi 0, %s68
      %s70 = sphi 0, %s68
      %s71 = sphi 0, %s70
      %s85 = sphi 0, %s71
      %s91 = sphi 0, %s93
      %s94 = sphi 0, %s91
      %s95 = sphi 0, %s94
      %s111 = sphi 0, %s95
    $region4: #{tpu_custom_call.1} parent=1 // loop_header_branch
      %16 = sbr.rel (%p14) target = $region8
    $region5: #{tpu_custom_call.1} parent=1 // loop_body
      %s18 = ssub.s32 %s13, 1
      %s19 = ssub.s32 %s13, 2
      %s20 = sadd.s32 %s13, 1
      %s21 = ssub.s32 %s13, %s20
      %p22 = scmp.eq.s32.totalorder %s21, 0
      %s24 = sadd.s32 %s23, 1
      %s25 = scalar_select %p22, %s23, %s24
      %p28 = pneg %p22
      %p29 = scmp.eq.s32.totalorder %s13, 1
      %p30 = por %p28, %p29
      %p31 = scmp.ne.s32.totalorder %s23, %s26
      %p32 = scmp.eq.s32.totalorder %s13, 0
      %p33 = por %p31, %p32
      %p34 = scmp.ne.s32.totalorder %s23, %s26
      %p35 = scmp.eq.s32.totalorder %s18, 1
      %p36 = por %p34, %p35
      %p37 = scmp.ne.s32.totalorder %s26, %s27
      %p38 = scmp.eq.s32.totalorder %s18, 0
      %p39 = por %p37, %p38
      %p40 = scmp.ne.s32.totalorder %s26, %s27
      %p41 = scmp.eq.s32.totalorder %s19, 1
      %p42 = por %p40, %p41
      %p44 = scmp.ne.s32.totalorder %s27, %s43
      %p45 = scmp.eq.s32.totalorder %s19, 0
      %p46 = por %p44, %p45
      %s48 = sadd.s32 %s47, 1
      %p51 = scmp.eq.s32.totalorder %s13, 1
      %p52 = scmp.ne.s32.totalorder %s47, %s49
      %p53 = scmp.eq.s32.totalorder %s13, 0
      %p54 = por %p52, %p53
      %p55 = scmp.ne.s32.totalorder %s47, %s49
      %p56 = scmp.eq.s32.totalorder %s18, 1
      %p57 = por %p55, %p56
      %p58 = scmp.ne.s32.totalorder %s49, %s50
      %p59 = scmp.eq.s32.totalorder %s18, 0
      %p60 = por %p58, %p59
      %p61 = scmp.ne.s32.totalorder %s49, %s50
      %p62 = scmp.eq.s32.totalorder %s19, 1
      %p63 = por %p61, %p62
      %p65 = scmp.ne.s32.totalorder %s50, %s64
      %p66 = scmp.eq.s32.totalorder %s19, 0
      %p67 = por %p65, %p66
      %s69 = sadd.s32 %s68, 1
      %p72 = scmp.eq.s32.totalorder %s13, 1
      %p73 = scmp.ne.s32.totalorder %s68, %s70
      %p74 = scmp.eq.s32.totalorder %s13, 0
      %p75 = por %p73, %p74
      %p76 = scmp.ne.s32.totalorder %s68, %s70
      %p77 = scmp.eq.s32.totalorder %s18, 1
      %p78 = por %p76, %p77
      %p79 = scmp.ne.s32.totalorder %s70, %s71
      %p80 = scmp.eq.s32.totalorder %s18, 0
      %p81 = por %p79, %p80
      %p82 = scmp.ne.s32.totalorder %s70, %s71
      %p83 = scmp.eq.s32.totalorder %s19, 1
      %p84 = por %p82, %p83
      %p86 = scmp.ne.s32.totalorder %s71, %s85
      %p87 = scmp.eq.s32.totalorder %s19, 0
      %p88 = por %p86, %p87
      %s89 = ssub.s32 %s13, %s20
      %p90 = scmp.eq.s32.totalorder %s89, 0
      %s92 = sadd.s32 %s91, 1
      %s93 = scalar_select %p90, %s91, %s92
      %p96 = pneg %p90
      %p97 = scmp.eq.s32.totalorder %s13, 1
      %p98 = por %p96, %p97
      %p99 = scmp.ne.s32.totalorder %s91, %s94
      %p100 = scmp.eq.s32.totalorder %s13, 0
      %p101 = por %p99, %p100
      %p102 = scmp.ne.s32.totalorder %s91, %s94
      %p103 = scmp.eq.s32.totalorder %s18, 1
      %p104 = por %p102, %p103
      %p105 = scmp.ne.s32.totalorder %s94, %s95
      %p106 = scmp.eq.s32.totalorder %s18, 0
      %p107 = por %p105, %p106
      %p108 = scmp.ne.s32.totalorder %s94, %s95
      %p109 = scmp.eq.s32.totalorder %s19, 1
      %p110 = por %p108, %p109
      %p112 = scmp.ne.s32.totalorder %s95, %s111
      %p113 = scmp.eq.s32.totalorder %s19, 0
      %p114 = por %p112, %p113
      %p115 = scmp.le.s32.totalorder 1, %s13
      %p116 = scmp.lt.s32.totalorder %s13, 3
      %p117 = pnand %p115, %p116
      %p118 = pneg %p117
      // Predicated region
      $region9: #{tpu_custom_call.1} parent=5 // pred_check
        _
      $region10: #{tpu_custom_call.1} parent=5 // pred_check_branch
        %120 = sbr.rel (%p117) target = $region12
      $region11: #{tpu_custom_call.1} parent=5 // pred_region
        %s121 = ssub.s32 %s13, 1
        // Predicated region
        $region13: #{tpu_custom_call.1} parent=11 // pred_check
          %p122 = pneg %p60
        $region14: #{tpu_custom_call.1} parent=11 // pred_check_branch
          %124 = sbr.rel (%p122) target = $region16
        $region15: #{tpu_custom_call.1} parent=11 // pred_region
          _
        $region16: #{tpu_custom_call.1} parent=11 // pred_fallthru
          _
        // Predicated region
        $region17: #{tpu_custom_call.1} parent=11 // pred_check
          %p125 = pneg %p81
        $region18: #{tpu_custom_call.1} parent=11 // pred_check_branch
          %127 = sbr.rel (%p125) target = $region20
        $region19: #{tpu_custom_call.1} parent=11 // pred_region
          _
        $region20: #{tpu_custom_call.1} parent=11 // pred_fallthru
          _
      $region12: #{tpu_custom_call.1} parent=5 // pred_fallthru
        _
      %p128 = scmp.lt.s32.totalorder %s13, 2
      // Predicated region
      $region21: #{tpu_custom_call.1} parent=5 // pred_check
        %p129 = pneg %p128
      $region22: #{tpu_custom_call.1} parent=5 // pred_check_branch
        %131 = sbr.rel (%p129) target = $region24
      $region23: #{tpu_custom_call.1} parent=5 // pred_region
        // Predicated region
        $region25: #{tpu_custom_call.1} parent=23 // pred_check
          %p132 = pneg %p33
        $region26: #{tpu_custom_call.1} parent=23 // pred_check_branch
          %134 = sbr.rel (%p132) target = $region28
        $region27: #{tpu_custom_call.1} parent=23 // pred_region
          %s135 = smul.u32 16, %s13
          %p136 = scmp.lt.s32.totalorder %s135, 31
          %s137 = scalar_select %p136, %s135, 31
          %s138 = smul.addr %s137, 8
          %s139 = scalar_lea.vmem %s0, %s138
          %s140 = smul.u32 16, %s13
        $region28: #{tpu_custom_call.1} parent=23 // pred_fallthru
          _
      $region24: #{tpu_custom_call.1} parent=5 // pred_fallthru
        _
      %p141 = scmp.le.s32.totalorder 1, %s13
      %p142 = scmp.lt.s32.totalorder %s13, 3
      %p143 = pnand %p141, %p142
      %p144 = pneg %p143
      // Predicated region
      $region29: #{tpu_custom_call.1} parent=5 // pred_check
        _
      $region30: #{tpu_custom_call.1} parent=5 // pred_check_branch
        %146 = sbr.rel (%p143) target = $region32
      $region31: #{tpu_custom_call.1} parent=5 // pred_region
        %s147 = ssub.s32 %s13, 1
        %s148 = smul.u32 16, %s18
        %p149 = scmp.lt.s32.totalorder %s148, 31
        %s150 = scalar_select %p149, %s148, 31
        %s151 = smul.addr %s150, 8
        %s152 = scalar_lea.vmem %s0, %s151
        %p153 = pneg %p39
        %p154 = pneg %p36
        %p155 = pneg %p60
        %p156 = pneg %p57
        %p157 = pneg %p81
        %p158 = pneg %p78
        %p159 = pneg %p107
        %p160 = pneg %p104
        %s161 = sand.u32 %s94, 1
        %s162 = scalar_lea.sflag [#allocation4], %s161
        %s163 = sand.u32 %s94, 1
        %s164 = smul.addr %s163, 2
        %s165 = scalar_lea.vmem [#allocation3], %s164
        %s166 = smul.u32 16, %s18
        %p167 = scmp.lt.s32.totalorder %s166, 31
        %s168 = scalar_select %p167, %s166, 31
        %s169 = smul.addr %s168, 8
        %s170 = scalar_lea.vmem %s0, %s169
        %s171 = smul.u32 16, %s18
        %v172 = vld [vmem:[%s170] sm:$0xff]
        %v173 = vld [vmem:[%s170 + $0x8] sm:$0xff]
        %v174 = vld [vmem:[%s170 + $0x10] sm:$0xff]
        %v175 = vld [vmem:[%s170 + $0x18] sm:$0xff]
        %v176 = vld [vmem:[%s170 + $0x20] sm:$0xff]
        %v177 = vld [vmem:[%s170 + $0x28] sm:$0xff]
        %v178 = vld [vmem:[%s170 + $0x30] sm:$0xff]
        %v179 = vld [vmem:[%s170 + $0x38] sm:$0xff]
        %v180 = vld [vmem:[%s170 + $0x40] sm:$0xff]
        %v181 = vld [vmem:[%s170 + $0x48] sm:$0xff]
        %v182 = vld [vmem:[%s170 + $0x50] sm:$0xff]
        %v183 = vld [vmem:[%s170 + $0x58] sm:$0xff]
        %v184 = vld [vmem:[%s170 + $0x60] sm:$0xff]
        %v185 = vld [vmem:[%s170 + $0x68] sm:$0xff]
        %v186 = vld [vmem:[%s170 + $0x70] sm:$0xff]
        %v187 = vld [vmem:[%s170 + $0x78] sm:$0xff]
        %v188 = vld [vmem:[%s1] sm:$0x1]
        %s189 = sld [smem:[#allocation2]]
        %v190 = vstv %s189
        %vm191 = vcmask 261120
        %v193 = vsel %vm191, %v188, 0
        %v196 = vsel %vm191, %v172, 0
        %v199 = vsel %vm191, %v173, 0
        %v202 = vsel %vm191, %v174, 0
        %v205 = vsel %vm191, %v175, 0
        %v208 = vsel %vm191, %v176, 0
        %v211 = vsel %vm191, %v177, 0
        %v214 = vsel %vm191, %v178, 0
        %v217 = vsel %vm191, %v179, 0
        %v220 = vsel %vm191, %v180, 0
        %v223 = vsel %vm191, %v181, 0
        %v226 = vsel %vm191, %v182, 0
        %v229 = vsel %vm191, %v183, 0
        %v232 = vsel %vm191, %v184, 0
        %v235 = vsel %vm191, %v185, 0
        %v238 = vsel %vm191, %v186, 0
        %v241 = vsel %vm191, %v187, 0
        %243 = vmatprep.subr.mxu0 0.0
        %244 = vmatpush1.xpose.msra.mxu0 %v196
        %245 = vmatprep.subr.mxu0 0.0
        %246 = vmatpush1.xpose.msra.mxu0 %v199
        %247 = vmatprep.subr.mxu0 0.0
        %248 = vmatpush1.xpose.msra.mxu0 %v202
        %249 = vmatprep.subr.mxu0 0.0
        %250 = vmatpush1.xpose.msra.mxu0 %v205
        %251 = vmatprep.subr.mxu0 0.0
        %252 = vmatpush1.xpose.msra.mxu0 %v208
        %253 = vmatprep.subr.mxu0 0.0
        %254 = vmatpush1.xpose.msra.mxu0 %v211
        %255 = vmatprep.subr.mxu0 0.0
        %256 = vmatpush1.xpose.msra.mxu0 %v214
        %257 = vmatprep.subr.mxu0 0.0
        %258 = vmatpush1.xpose.msra.mxu0 %v217
        %259 = vmatprep.subr.mxu0 0.0
        %260 = vmatpush1.xpose.msra.mxu0 %v220
        %261 = vmatprep.subr.mxu0 0.0
        %262 = vmatpush1.xpose.msra.mxu0 %v223
        %263 = vmatprep.subr.mxu0 0.0
        %264 = vmatpush1.xpose.msra.mxu0 %v226
        %265 = vmatprep.subr.mxu0 0.0
        %266 = vmatpush1.xpose.msra.mxu0 %v229
        %267 = vmatprep.subr.mxu0 0.0
        %268 = vmatpush1.xpose.msra.mxu0 %v232
        %269 = vmatprep.subr.mxu0 0.0
        %270 = vmatpush1.xpose.msra.mxu0 %v235
        %271 = vmatprep.subr.mxu0 0.0
        %272 = vmatpush1.xpose.msra.mxu0 %v238
        %273 = vmatprep.subr.mxu0 0.0
        %274 = vmatpush1.xpose.msra.mxu0 %v241
        %275 = vmatprep.subr.mxu0 0.0
        %276 = vmatpush1.xpose.msra.mxu0 0.0
        %277 = vmatprep.subr.mxu0 0.0
        %278 = vmatpush1.xpose.msra.mxu0 0.0
        %279 = vmatprep.subr.mxu0 0.0
        %280 = vmatpush1.xpose.msra.mxu0 0.0
        %281 = vmatprep.subr.mxu0 0.0
        %282 = vmatpush1.xpose.msra.mxu0 0.0
        %283 = vmatprep.subr.mxu0 0.0
        %284 = vmatpush1.xpose.msra.mxu0 0.0
        %285 = vmatprep.subr.mxu0 0.0
        %286 = vmatpush1.xpose.msra.mxu0 0.0
        %287 = vmatprep.subr.mxu0 0.0
        %288 = vmatpush1.xpose.msra.mxu0 0.0
        %289 = vmatprep.subr.mxu0 0.0
        %290 = vmatpush1.xpose.msra.mxu0 0.0
        %291 = vmatprep.subr.mxu0 0.0
        %292 = vmatpush1.xpose.msra.mxu0 0.0
        %293 = vmatprep.subr.mxu0 0.0
        %294 = vmatpush1.xpose.msra.mxu0 0.0
        %295 = vmatprep.subr.mxu0 0.0
        %296 = vmatpush1.xpose.msra.mxu0 0.0
        %297 = vmatprep.subr.mxu0 0.0
        %298 = vmatpush1.xpose.msra.mxu0 0.0
        %299 = vmatprep.subr.mxu0 0.0
        %300 = vmatpush1.xpose.msra.mxu0 0.0
        %301 = vmatprep.subr.mxu0 0.0
        %302 = vmatpush1.xpose.msra.mxu0 0.0
        %303 = vmatprep.subr.mxu0 0.0
        %304 = vmatpush1.xpose.msra.mxu0 0.0
        %305 = vmatprep.subr.mxu0 0.0
        %306 = vmatpush1.xpose.msra.mxu0 0.0
        %307 = vmatprep.mubr.f32.mxu0 0.0
        %308 = vmatmul.mubr.f32.gmra.mrb[0].mxu0 %v193
        %v309 = vpop.f32.mrb[0].mxu0
        %v310 = vadd.f32 %v190, %v309
        %v311 = vpop.f32.mrb[0].mxu0
        %312 = vdwg.mxu0
        %v313 = vsub.f32 0.0, %v310
        %v314 = vmul.f32 %v313, 1.442695
        %v315 = vpow.pop %v314
        %v316 = vadd.f32 %v315, 1.0
        %v317 = vrcp.pop %v316
        %v318 = vmul.f32 1.0, %v317
        %319 = vst [vmem:[%s165] sm:$0x1] %v318
        %v320 = vsub.f32 1.0, %v318
        %321 = vst [vmem:[%s165 + $0x1] sm:$0x1] %v320
        %s322 = sand.u32 %s94, 1
        %s323 = scalar_lea.sflag [#allocation4], %s322
        %s324 = sand.u32 %s94, 1
        %s325 = smul.addr %s324, 2
        %s326 = scalar_lea.vmem [#allocation3], %s325
        // Predicated region
        $region33: #{tpu_custom_call.1} parent=31 // pred_check
          %p327 = pneg %p104
        $region34: #{tpu_custom_call.1} parent=31 // pred_check_branch
          %329 = sbr.rel (%p327) target = $region36
        $region35: #{tpu_custom_call.1} parent=31 // pred_region
          %s331 = ssub.s32 32, 32
          %332 = vsyncadd %s323, %s331
          %s333 = smul.addr %s18, 32
          %s334 = scalar_lea.hbm %s3, %s333
          %s336 = sshll.u32 %s326, 4
          %s337 = int_to_ptr.vmem [resolvable:$true] %s336
          %339 = dma.vmem_to_hbm [thread:$0]  %s337, 32, %s334, %s323
        $region36: #{tpu_custom_call.1} parent=31 // pred_fallthru
          _
      $region32: #{tpu_custom_call.1} parent=5 // pred_fallthru
        _
      %p340 = scmp.le.s32.totalorder 2, %s13
      // Predicated region
      $region37: #{tpu_custom_call.1} parent=5 // pred_check
        %p341 = pneg %p340
      $region38: #{tpu_custom_call.1} parent=5 // pred_check_branch
        %343 = sbr.rel (%p341) target = $region40
      $region39: #{tpu_custom_call.1} parent=5 // pred_region
        %s344 = ssub.s32 %s13, 2
        // Predicated region
        $region41: #{tpu_custom_call.1} parent=39 // pred_check
          %p345 = pneg %p110
        $region42: #{tpu_custom_call.1} parent=39 // pred_check_branch
          %347 = sbr.rel (%p345) target = $region44
        $region43: #{tpu_custom_call.1} parent=39 // pred_region
          %s348 = sand.u32 %s95, 1
          %s349 = scalar_lea.sflag [#allocation4], %s348
          %s350 = sand.u32 %s95, 1
          %s351 = smul.addr %s350, 2
          %s352 = scalar_lea.vmem [#allocation3], %s351
          %353 = dma.done %s349, 32
        $region44: #{tpu_custom_call.1} parent=39 // pred_fallthru
          _
      $region40: #{tpu_custom_call.1} parent=5 // pred_fallthru
        _
    $region6: #{tpu_custom_call.1} parent=1 // loop_footer
      %s17 = sadd.s32 1, %s13
    $region7: #{tpu_custom_call.1} parent=1 // loop_footer_branch
      %12 = sbr.rel target = $region3
    $region8: #{tpu_custom_call.1} parent=1 // loop_exit
      _
    %354 = vsyncpa [#allocation4], 1
    %s355 = scalar_lea.sflag [#allocation4], 1
    %356 = vsyncpa %s355, 1

</llo_original>
